<compile_context>
chip_gen: v7x
topology: tpu7x:2x2x1
jax: 0.10.0
libtpu: 0.0.40
codegen_flags: <defaults>
</compile_context>

<pallas_src>
import functools

import numpy as np

import jax
import jax.numpy as jnp
from jax import lax
from jax.experimental import pallas as pl
from jax.experimental.pallas import tpu as pltpu


# ----------------------------------------------------------------------------
# Fused Pallas kernel: out = tanh(leaky(leaky(x@W1+b1)@W2+b2)@W3+b3)
# ----------------------------------------------------------------------------
def _generator_fused_kernel(x_ref, w1_ref, b1_ref, w2_ref, b2_ref,
                            w3_ref, b3_ref, o_ref):
    x = x_ref[...]                                                   # (B, nz)

    # conv1 (4x4, pad 3 on a 1x1 input) == dense matmul, NCHW-flat columns.
    h1 = jnp.dot(x, w1_ref[...], preferred_element_type=jnp.float32) + b1_ref[...]
    h1 = jnp.where(h1 > 0, h1, 0.2 * h1)                             # LeakyReLU(0.2)

    # conv2 (3x3, pad 1 on the fixed 4x4 grid) == structured matmul.
    h2 = jnp.dot(h1, w2_ref[...], preferred_element_type=jnp.float32) + b2_ref[...]
    h2 = jnp.where(h2 > 0, h2, 0.2 * h2)

    # conv3 (1x1) + Tanh == block-diagonal matmul into a lane-dense slab.
    # NOTE: default dot precision already matches the reference to <5e-2; pass
    # precision=lax.Precision.HIGHEST here if tighter f32 parity is required.
    h3 = jnp.dot(h2, w3_ref[...], preferred_element_type=jnp.float32) + b3_ref[...]
    o_ref[...] = jnp.tanh(h3)


# ----------------------------------------------------------------------------
# One-time parameter packing (exact, numpy) — hoisted out of the forward path.
# ----------------------------------------------------------------------------
def pack_params(params, *, nz, ngf, nc):
    w1 = np.asarray(params["w1"], np.float32)        # (ngf, nz, 4, 4)
    b1 = np.asarray(params["b1"], np.float32)        # (ngf,)
    w2 = np.asarray(params["w2"], np.float32)        # (ngf, ngf, 3, 3)
    b2 = np.asarray(params["b2"], np.float32)        # (ngf,)
    w3 = np.asarray(params["w3"], np.float32).reshape(nc, ngf)
    b3 = np.asarray(params["b3"], np.float32)        # (nc,)

    # --- conv1: output(oc,i,j) = sum_ic w1[oc,ic,3-i,3-j] * x[ic] + b1[oc]
    # Columns ordered NCHW-flat: col = oc*16 + i*4 + j.
    w1_flip = w1[:, :, ::-1, ::-1]
    w1_mat = np.transpose(w1_flip, (1, 0, 2, 3)).reshape(nz, ngf * 16)
    b1_row = np.repeat(b1, 16).reshape(1, ngf * 16)

    # --- conv2: structured (16*ngf, 16*ngf) matrix encoding the 3x3/pad-1
    # connectivity on the 4x4 grid. Rows = (ic, p_in), cols = (oc, p_out).
    w2_big = np.zeros((ngf, 16, ngf, 16), np.float32)   # (ic, p_in, oc, p_out)
    for io in range(4):
        for jo in range(4):
            for ki in range(3):
                for kj in range(3):
                    ii, jj = io + ki - 1, jo + kj - 1
                    if 0 <= ii < 4 and 0 <= jj < 4:
                        w2_big[:, ii * 4 + jj, :, io * 4 + jo] += w2[:, :, ki, kj].T
    w2_mat = w2_big.reshape(ngf * 16, ngf * 16)
    b2_row = np.repeat(b2, 16).reshape(1, ngf * 16)

    # --- conv3 (1x1): block-diagonal over the 16 pixels, zero-padded to a
    # lane-dense output width (multiple of 128) so the final store is unmasked.
    n_valid = nc * 16
    n_pad = ((n_valid + 127) // 128) * 128
    w3_big = np.zeros((ngf, 16, nc, 16), np.float32)     # (ic, p, oc, p)
    for p in range(16):
        w3_big[:, p, :, p] = w3.T
    w3_mat = np.zeros((ngf * 16, n_pad), np.float32)
    w3_mat[:, :n_valid] = w3_big.reshape(ngf * 16, n_valid)
    b3_row = np.zeros((1, n_pad), np.float32)
    b3_row[0, :n_valid] = np.repeat(b3, 16)

    return {
        "w1": jnp.asarray(w1_mat), "b1": jnp.asarray(b1_row),
        "w2": jnp.asarray(w2_mat), "b2": jnp.asarray(b2_row),
        "w3": jnp.asarray(w3_mat), "b3": jnp.asarray(b3_row),
    }


# ----------------------------------------------------------------------------
# Generator forward (single fused Pallas call)
# ----------------------------------------------------------------------------
def generator_forward(x, packed, *, nz, ngf, nc):
    """x: (B, nz, 1, 1) or (B, nz) float32. Returns (B, nc, 4, 4) NCHW."""
    B = x.shape[0]
    xf = x.reshape(B, -1).astype(jnp.float32)       # == x.view(B, -1, 1, 1) squeezed
    assert xf.shape[1] == nz

    n_pad = packed["w3"].shape[1]
    out_pad = pl.pallas_call(
        _generator_fused_kernel,
        out_shape=jax.ShapeDtypeStruct((B, n_pad), jnp.float32),
        in_specs=[pl.BlockSpec(memory_space=pltpu.MemorySpace.VMEM)] * 7,
        out_specs=pl.BlockSpec(memory_space=pltpu.MemorySpace.VMEM),
    )(xf, packed["w1"], packed["b1"], packed["w2"], packed["b2"],
      packed["w3"], packed["b3"])

    # Lane-dense slab -> NCHW (column order is already oc*16 + i*4 + j).
    return out_pad[:, :nc * 16].reshape(B, nc, 4, 4)


# ----------------------------------------------------------------------------
# Pure-JAX reference (lax.conv, HIGHEST precision) for a correctness check
# ----------------------------------------------------------------------------
def generator_forward_ref(x, params, *, nz, ngf, nc):
    B = x.shape[0]
    h = x.reshape(B, nz, 1, 1).astype(jnp.float32)
    dn = ("NCHW", "OIHW", "NCHW")
    conv = functools.partial(
        lax.conv_general_dilated,
        window_strides=(1, 1),
        dimension_numbers=dn,
        precision=lax.Precision.HIGHEST,
    )
    leaky = lambda y: jnp.where(y > 0, y, 0.2 * y)
    h = conv(h, params["w1"], padding=[(3, 3), (3, 3)]) + params["b1"][None, :, None, None]
    h = leaky(h)
    h = conv(h, params["w2"], padding=[(1, 1), (1, 1)]) + params["b2"][None, :, None, None]
    h = leaky(h)
    h = conv(h, params["w3"], padding=[(0, 0), (0, 0)]) + params["b3"][None, :, None, None]
    return jnp.tanh(h)


# ----------------------------------------------------------------------------
# Deterministic parameter init (shapes from Generator.__init__ / first_block)
# ----------------------------------------------------------------------------
def init_params(key, *, nz, ngf, nc):
    ks = jax.random.split(key, 6)
    scale = 0.1
    return {
        "w1": scale * jax.random.normal(ks[0], (ngf, nz, 4, 4), jnp.float32),
        "b1": scale * jax.random.normal(ks[1], (ngf,), jnp.float32),
        "w2": scale * jax.random.normal(ks[2], (ngf, ngf, 3, 3), jnp.float32),
        "b2": scale * jax.random.normal(ks[3], (ngf,), jnp.float32),
        "w3": scale * jax.random.normal(ks[4], (nc, ngf, 1, 1), jnp.float32),
        "b3": scale * jax.random.normal(ks[5], (nc,), jnp.float32),
    }


if __name__ == "__main__":
    B, nz, ngf, nc = 2, 32, 32, 3

    key = jax.random.PRNGKey(0)
    k_x, k_p = jax.random.split(key)
    x = jax.random.normal(k_x, (B, nz, 1, 1), jnp.float32)
    params = init_params(k_p, nz=nz, ngf=ngf, nc=nc)

    # Pack weights once (flip / im2col / 1x1 expansion / bias repeat hoisted
    # out of the jitted forward path).
    packed = pack_params(params, nz=nz, ngf=ngf, nc=nc)

    fwd = jax.jit(functools.partial(generator_forward, nz=nz, ngf=ngf, nc=nc))
    out = jax.block_until_ready(fwd(x, packed))
    assert out.shape == (B, nc, 4, 4), out.shape

    ref = jax.block_until_ready(generator_forward_ref(x, params, nz=nz, ngf=ngf, nc=nc))
    max_err = float(jnp.max(jnp.abs(out - ref)))
    assert max_err < 5e-2, f"mismatch vs reference: {max_err}"

    # TODO(synk): progressive-growth stages (grow_network / fadein / flush) are
    # architecture mutation, not a forward op — only the init 4x4 generator is
    # implemented here.
    print("KERNEL_OK")
</pallas_src>

<mosaic_0001>
module attributes {stable_mosaic.version = 11 : i64} {
  func.func @_generator_fused_kernel(%arg0: memref<2x32xf32, #tpu.memory_space<vmem>>, %arg1: memref<32x512xf32, #tpu.memory_space<vmem>>, %arg2: memref<1x512xf32, #tpu.memory_space<vmem>>, %arg3: memref<512x512xf32, #tpu.memory_space<vmem>>, %arg4: memref<1x512xf32, #tpu.memory_space<vmem>>, %arg5: memref<512x128xf32, #tpu.memory_space<vmem>>, %arg6: memref<1x128xf32, #tpu.memory_space<vmem>>, %arg7: memref<2x128xf32, #tpu.memory_space<vmem>>) attributes {dimension_semantics = [], scalar_prefetch = 0 : i64, scratch_operands = 0 : i64, tpu.core_type = #tpu.core_type<tc>} {
    %c0 = arith.constant 0 : index
    %c0_0 = arith.constant 0 : index
    %0 = vector.load %arg0[%c0, %c0_0] : memref<2x32xf32, #tpu.memory_space<vmem>>, vector<2x32xf32>
    %c0_1 = arith.constant 0 : index
    %c0_2 = arith.constant 0 : index
    %1 = vector.load %arg1[%c0_1, %c0_2] : memref<32x512xf32, #tpu.memory_space<vmem>>, vector<32x512xf32>
    %cst = arith.constant dense<0.000000e+00> : vector<2x512xf32>
    %2 = tpu.matmul %0, %1, %cst {dimension_numbers = #tpu.dot_dimension_numbers<[1], [0], [0], [1], [0, 0, 1, 1], [], []>} : vector<2x32xf32>, vector<32x512xf32>, vector<2x512xf32> -> vector<2x512xf32>
    %c0_3 = arith.constant 0 : index
    %c0_4 = arith.constant 0 : index
    %3 = vector.load %arg2[%c0_3, %c0_4] : memref<1x512xf32, #tpu.memory_space<vmem>>, vector<1x512xf32>
    %4 = vector.broadcast %3 : vector<1x512xf32> to vector<2x512xf32>
    %5 = arith.addf %2, %4 : vector<2x512xf32>
    %cst_5 = arith.constant 0.000000e+00 : f32
    %6 = vector.broadcast %cst_5 : f32 to vector<2x512xf32>
    %7 = arith.cmpf ogt, %5, %6 : vector<2x512xf32>
    %cst_6 = arith.constant 2.000000e-01 : f32
    %8 = vector.broadcast %cst_6 : f32 to vector<2x512xf32>
    %9 = arith.mulf %8, %5 : vector<2x512xf32>
    %10 = arith.select %7, %5, %9 : vector<2x512xi1>, vector<2x512xf32>
    %c0_7 = arith.constant 0 : index
    %c0_8 = arith.constant 0 : index
    %11 = vector.load %arg3[%c0_7, %c0_8] : memref<512x512xf32, #tpu.memory_space<vmem>>, vector<512x512xf32>
    %cst_9 = arith.constant dense<0.000000e+00> : vector<2x512xf32>
    %12 = tpu.matmul %10, %11, %cst_9 {dimension_numbers = #tpu.dot_dimension_numbers<[1], [0], [0], [1], [0, 0, 1, 1], [], []>} : vector<2x512xf32>, vector<512x512xf32>, vector<2x512xf32> -> vector<2x512xf32>
    %c0_10 = arith.constant 0 : index
    %c0_11 = arith.constant 0 : index
    %13 = vector.load %arg4[%c0_10, %c0_11] : memref<1x512xf32, #tpu.memory_space<vmem>>, vector<1x512xf32>
    %14 = vector.broadcast %13 : vector<1x512xf32> to vector<2x512xf32>
    %15 = arith.addf %12, %14 : vector<2x512xf32>
    %cst_12 = arith.constant 0.000000e+00 : f32
    %16 = vector.broadcast %cst_12 : f32 to vector<2x512xf32>
    %17 = arith.cmpf ogt, %15, %16 : vector<2x512xf32>
    %cst_13 = arith.constant 2.000000e-01 : f32
    %18 = vector.broadcast %cst_13 : f32 to vector<2x512xf32>
    %19 = arith.mulf %18, %15 : vector<2x512xf32>
    %20 = arith.select %17, %15, %19 : vector<2x512xi1>, vector<2x512xf32>
    %c0_14 = arith.constant 0 : index
    %c0_15 = arith.constant 0 : index
    %21 = vector.load %arg5[%c0_14, %c0_15] : memref<512x128xf32, #tpu.memory_space<vmem>>, vector<512x128xf32>
    %cst_16 = arith.constant dense<0.000000e+00> : vector<2x128xf32>
    %22 = tpu.matmul %20, %21, %cst_16 {dimension_numbers = #tpu.dot_dimension_numbers<[1], [0], [0], [1], [0, 0, 1, 1], [], []>} : vector<2x512xf32>, vector<512x128xf32>, vector<2x128xf32> -> vector<2x128xf32>
    %c0_17 = arith.constant 0 : index
    %c0_18 = arith.constant 0 : index
    %23 = vector.load %arg6[%c0_17, %c0_18] : memref<1x128xf32, #tpu.memory_space<vmem>>, vector<1x128xf32>
    %24 = vector.broadcast %23 : vector<1x128xf32> to vector<2x128xf32>
    %25 = arith.addf %22, %24 : vector<2x128xf32>
    %26 = math.tanh %25 : vector<2x128xf32>
    %c0_19 = arith.constant 0 : index
    %c0_20 = arith.constant 0 : index
    %27 = vector.load %arg7[%c0_19, %c0_20] : memref<2x128xf32, #tpu.memory_space<vmem>>, vector<2x128xf32>
    tpu.vector_store %arg7[%c0_19, %c0_20], %26 {strides = array<i32>} : memref<2x128xf32, #tpu.memory_space<vmem>>, vector<2x128xf32>,
    return
  }
}

</mosaic_0001>

<llo_original>
// kernel: generator_forward.1
$region0: #{generator_forward.1}
  #allocation0 [shape = 'u32[]', space=smem, size = 0x4, offset = 0x4, fixed_abs, tag = 'smem constant byte address 0x4 - core index']
  #allocation1 [shape = 'u32[144,128]{1,0:T(1,128)}', space=vmem, size = 0x12000, scoped, tag = 'internal scratch']
  %s0 = inlined_call_operand.vmem [shape: f32[2,32], index: 0, kind: input, shape index: {}]
  %s1 = inlined_call_operand.hbm [shape: f32[32,512], index: 1, kind: input, shape index: {}]
  %s2 = inlined_call_operand.vmem [shape: f32[1,512], index: 2, kind: input, shape index: {}]
  %s3 = inlined_call_operand.hbm [shape: f32[512,512], index: 3, kind: input, shape index: {}]
  %s4 = inlined_call_operand.vmem [shape: f32[1,512], index: 4, kind: input, shape index: {}]
  %s5 = inlined_call_operand.hbm [shape: f32[512,128], index: 5, kind: input, shape index: {}]
  %s6 = inlined_call_operand.vmem [shape: f32[1,128], index: 6, kind: input, shape index: {}]
  %s7 = inlined_call_operand.vmem [shape: f32[2,128], index: 7, kind: output, shape index: {}]
  %s8 = sld [smem:[#allocation0]]
  $region50: #{generator_forward.1} parent=0
    _
  %s10 = ssub.s32 1, %s8
  %s11 = scalar_select 0, %s10, %s8
  $region1: #{generator_forward.1} parent=0
    #allocation2 [shape = 'u8[65536]{0}', space=vmem, size = 0x10000, scoped, tag = 'input window, operand 1, single buffered']
    #allocation3 [shape = 's32[1]{0}', space=sflag, size = 0x4, scoped, tag = 'scoped memory for generator_forward.1']
    #allocation4 [shape = 'u8[1048576]{0}', space=vmem, size = 0x100000, scoped, tag = 'input window, operand 3, single buffered']
    #allocation5 [shape = 's32[1]{0}', space=sflag, size = 0x4, scoped, tag = 'scoped memory for generator_forward.1']
    #allocation6 [shape = 'u8[262144]{0}', space=vmem, size = 0x40000, scoped, tag = 'input window, operand 5, single buffered']
    %12 = vsyncpa [#allocation3], 0
    %13 = vsyncpa [#allocation5], 0
    // Predicated region
    $region2: #{generator_forward.1} parent=1 // pred_check
      _
    $region3: #{generator_forward.1} parent=1 // pred_check_branch
      %15 = sbr.rel (0) target = $region5
    $region4: #{generator_forward.1} parent=1 // pred_region
      _
    $region5: #{generator_forward.1} parent=1 // pred_fallthru
      _
    // Predicated region
    $region6: #{generator_forward.1} parent=1 // pred_check
      _
    $region7: #{generator_forward.1} parent=1 // pred_check_branch
      %17 = sbr.rel (0) target = $region9
    $region8: #{generator_forward.1} parent=1 // pred_region
      %s19 = ssub.s32 2048, 2048
      %20 = vsyncadd [#allocation3], %s19
      %s21 = sshll.u32 [#allocation2], 4
      %s22 = int_to_ptr.vmem [resolvable:$true] %s21
      %27 = dma.hbm_to_vmem [thread:$0]  %s1, 2048, %s22, [#allocation3], 512, 512, 32
    $region9: #{generator_forward.1} parent=1 // pred_fallthru
      _
    // Predicated region
    $region10: #{generator_forward.1} parent=1 // pred_check
      _
    $region11: #{generator_forward.1} parent=1 // pred_check_branch
      %29 = sbr.rel (0) target = $region13
    $region12: #{generator_forward.1} parent=1 // pred_region
      _
    $region13: #{generator_forward.1} parent=1 // pred_fallthru
      _
    // Predicated region
    $region14: #{generator_forward.1} parent=1 // pred_check
      _
    $region15: #{generator_forward.1} parent=1 // pred_check_branch
      %31 = sbr.rel (0) target = $region17
    $region16: #{generator_forward.1} parent=1 // pred_region
      %s33 = ssub.s32 32768, 32768
      %34 = vsyncadd [#allocation5], %s33
      %s35 = sshll.u32 [#allocation4], 4
      %s36 = int_to_ptr.vmem [resolvable:$true] %s35
      %41 = dma.hbm_to_vmem [thread:$0]  %s3, 32768, %s36, [#allocation5], 512, 512, 32
    $region17: #{generator_forward.1} parent=1 // pred_fallthru
      _
    // Predicated region
    $region18: #{generator_forward.1} parent=1 // pred_check
      _
    $region19: #{generator_forward.1} parent=1 // pred_check_branch
      %43 = sbr.rel (0) target = $region21
    $region20: #{generator_forward.1} parent=1 // pred_region
      _
    $region21: #{generator_forward.1} parent=1 // pred_fallthru
      _
    // Predicated region
    $region22: #{generator_forward.1} parent=1 // pred_check
      _
    $region23: #{generator_forward.1} parent=1 // pred_check_branch
      %45 = sbr.rel (0) target = $region25
    $region24: #{generator_forward.1} parent=1 // pred_region
      %s47 = ssub.s32 8192, 8192
      %48 = vsyncadd [#allocation5], %s47
      %s49 = sshll.u32 [#allocation6], 4
      %s50 = int_to_ptr.vmem [resolvable:$true] %s49
      %55 = dma.hbm_to_vmem [thread:$0]  %s5, 8192, %s50, [#allocation5], 128, 128, 8
    $region25: #{generator_forward.1} parent=1 // pred_fallthru
      _
    // Predicated region
    $region26: #{generator_forward.1} parent=1 // pred_check
      _
    $region27: #{generator_forward.1} parent=1 // pred_check_branch
      %57 = sbr.rel (0) target = $region29
    $region28: #{generator_forward.1} parent=1 // pred_region
      _
    $region29: #{generator_forward.1} parent=1 // pred_fallthru
      _
    // Predicated region
    $region30: #{generator_forward.1} parent=1 // pred_check
      _
    $region31: #{generator_forward.1} parent=1 // pred_check_branch
      %59 = sbr.rel (0) target = $region33
    $region32: #{generator_forward.1} parent=1 // pred_region
      %60 = dma.done [#allocation3], 2048
    $region33: #{generator_forward.1} parent=1 // pred_fallthru
      _
    // Predicated region
    $region34: #{generator_forward.1} parent=1 // pred_check
      _
    $region35: #{generator_forward.1} parent=1 // pred_check_branch
      %62 = sbr.rel (0) target = $region37
    $region36: #{generator_forward.1} parent=1 // pred_region
      %63 = dma.done [#allocation5], 32768
    $region37: #{generator_forward.1} parent=1 // pred_fallthru
      _
    // Predicated region
    $region38: #{generator_forward.1} parent=1 // pred_check
      _
    $region39: #{generator_forward.1} parent=1 // pred_check_branch
      %65 = sbr.rel (0) target = $region41
    $region40: #{generator_forward.1} parent=1 // pred_region
      %66 = dma.done [#allocation5], 8192
    $region41: #{generator_forward.1} parent=1 // pred_fallthru
      _
    %v67 = vld [vmem:[%s0] sm:$0x3]
    %v68 = vld [vmem:[#allocation2] sm:$0xff]
    %v69 = vld [vmem:[#allocation2 + $0x8] sm:$0xff]
    %v70 = vld [vmem:[#allocation2 + $0x10] sm:$0xff]
    %v71 = vld [vmem:[#allocation2 + $0x18] sm:$0xff]
    %v72 = vld [vmem:[#allocation2 + $0x20] sm:$0xff]
    %v73 = vld [vmem:[#allocation2 + $0x28] sm:$0xff]
    %v74 = vld [vmem:[#allocation2 + $0x30] sm:$0xff]
    %v75 = vld [vmem:[#allocation2 + $0x38] sm:$0xff]
    %v76 = vld [vmem:[#allocation2 + $0x40] sm:$0xff]
    %v77 = vld [vmem:[#allocation2 + $0x48] sm:$0xff]
    %v78 = vld [vmem:[#allocation2 + $0x50] sm:$0xff]
    %v79 = vld [vmem:[#allocation2 + $0x58] sm:$0xff]
    %v80 = vld [vmem:[#allocation2 + $0x60] sm:$0xff]
    %v81 = vld [vmem:[#allocation2 + $0x68] sm:$0xff]
    %v82 = vld [vmem:[#allocation2 + $0x70] sm:$0xff]
    %v83 = vld [vmem:[#allocation2 + $0x78] sm:$0xff]
    %v84 = vld [vmem:[%s2] sm:$0xf]
    %v86 = vlaneseq
    %v87 = vshrl.u32 %v86, 7
    %v88 = vsub.s32 0, %v87
    %v89 = vrot.slane %v84, %v88
    %v90 = vlaneseq
    %v91 = vshrl.u32 %v90, 7
    %v92 = vsub.s32 1, %v91
    %v93 = vrot.slane %v84, %v92
    %v94 = vlaneseq
    %v95 = vshrl.u32 %v94, 7
    %v96 = vsub.s32 2, %v95
    %v97 = vrot.slane %v84, %v96
    %v98 = vlaneseq
    %v99 = vshrl.u32 %v98, 7
    %v100 = vsub.s32 3, %v99
    %v101 = vrot.slane %v84, %v100
    %vm106 = vcmask 261120
    %v108 = vsel %vm106, %v67, 0
    %110 = vmatprep.subr.mxu0 %v69
    %111 = vmatpush1.msra.mxu0 %v68
    %112 = vmatprep.subr.mxu0 %v73
    %113 = vmatpush1.msra.mxu0 %v72
    %114 = vmatprep.subr.mxu0 %v77
    %115 = vmatpush1.msra.mxu0 %v76
    %116 = vmatprep.subr.mxu0 %v81
    %117 = vmatpush1.msra.mxu0 %v80
    %118 = vmatprep.subr.mxu0 0.0
    %119 = vmatpush1.msra.mxu0 0.0
    %120 = vmatprep.subr.mxu0 0.0
    %121 = vmatpush1.msra.mxu0 0.0
    %122 = vmatprep.subr.mxu0 0.0
    %123 = vmatpush1.msra.mxu0 0.0
    %124 = vmatprep.subr.mxu0 0.0
    %125 = vmatpush1.msra.mxu0 0.0
    %126 = vmatprep.subr.mxu0 0.0
    %127 = vmatpush1.msra.mxu0 0.0
    %128 = vmatprep.subr.mxu0 0.0
    %129 = vmatpush1.msra.mxu0 0.0
    %130 = vmatprep.subr.mxu0 0.0
    %131 = vmatpush1.msra.mxu0 0.0
    %132 = vmatprep.subr.mxu0 0.0
    %133 = vmatpush1.msra.mxu0 0.0
    %134 = vmatprep.subr.mxu0 0.0
    %135 = vmatpush1.msra.mxu0 0.0
    %136 = vmatprep.subr.mxu0 0.0
    %137 = vmatpush1.msra.mxu0 0.0
    %138 = vmatprep.subr.mxu0 0.0
    %139 = vmatpush1.msra.mxu0 0.0
    %140 = vmatprep.subr.mxu0 0.0
    %141 = vmatpush1.msra.mxu0 0.0
    %142 = vmatprep.subr.mxu0 0.0
    %143 = vmatpush1.msra.mxu0 0.0
    %144 = vmatprep.subr.mxu0 0.0
    %145 = vmatpush1.msra.mxu0 0.0
    %146 = vmatprep.subr.mxu0 0.0
    %147 = vmatpush1.msra.mxu0 0.0
    %148 = vmatprep.subr.mxu0 0.0
    %149 = vmatpush1.msra.mxu0 0.0
    %150 = vmatprep.subr.mxu0 0.0
    %151 = vmatpush1.msra.mxu0 0.0
    %152 = vmatprep.subr.mxu0 0.0
    %153 = vmatpush1.msra.mxu0 0.0
    %154 = vmatprep.subr.mxu0 0.0
    %155 = vmatpush1.msra.mxu0 0.0
    %156 = vmatprep.subr.mxu0 0.0
    %157 = vmatpush1.msra.mxu0 0.0
    %158 = vmatprep.subr.mxu0 0.0
    %159 = vmatpush1.msra.mxu0 0.0
    %160 = vmatprep.subr.mxu0 0.0
    %161 = vmatpush1.msra.mxu0 0.0
    %162 = vmatprep.subr.mxu0 0.0
    %163 = vmatpush1.msra.mxu0 0.0
    %164 = vmatprep.subr.mxu0 0.0
    %165 = vmatpush1.msra.mxu0 0.0
    %166 = vmatprep.subr.mxu0 0.0
    %167 = vmatpush1.msra.mxu0 0.0
    %168 = vmatprep.subr.mxu0 0.0
    %169 = vmatpush1.msra.mxu0 0.0
    %170 = vmatprep.subr.mxu0 0.0
    %171 = vmatpush1.msra.mxu0 0.0
    %172 = vmatprep.subr.mxu0 0.0
    %173 = vmatpush1.msra.mxu0 0.0
    %174 = vmatprep.mubr.f32.mxu0 0.0
    %175 = vmatmul.mubr.f32.gmra.mrb[0].mxu0 %v108
    %v176 = vpop.f32.mrb[0].mxu0
    %v177 = vadd.f32 %v89, %v176
    %v178 = vpop.f32.mrb[0].mxu0
    %v179 = vadd.f32 %v93, %v178
    %180 = vdwg.mxu0
    %181 = vmatprep.subr.mxu0 %v71
    %182 = vmatpush1.msra.mxu0 %v70
    %183 = vmatprep.subr.mxu0 %v75
    %184 = vmatpush1.msra.mxu0 %v74
    %185 = vmatprep.subr.mxu0 %v79
    %186 = vmatpush1.msra.mxu0 %v78
    %187 = vmatprep.subr.mxu0 %v83
    %188 = vmatpush1.msra.mxu0 %v82
    %189 = vmatprep.subr.mxu0 0.0
    %190 = vmatpush1.msra.mxu0 0.0
    %191 = vmatprep.subr.mxu0 0.0
    %192 = vmatpush1.msra.mxu0 0.0
    %193 = vmatprep.subr.mxu0 0.0
    %194 = vmatpush1.msra.mxu0 0.0
    %195 = vmatprep.subr.mxu0 0.0
    %196 = vmatpush1.msra.mxu0 0.0
    %197 = vmatprep.subr.mxu0 0.0
    %198 = vmatpush1.msra.mxu0 0.0
    %199 = vmatprep.subr.mxu0 0.0
    %200 = vmatpush1.msra.mxu0 0.0
    %201 = vmatprep.subr.mxu0 0.0
    %202 = vmatpush1.msra.mxu0 0.0
    %203 = vmatprep.subr.mxu0 0.0
    %204 = vmatpush1.msra.mxu0 0.0
    %205 = vmatprep.subr.mxu0 0.0
    %206 = vmatpush1.msra.mxu0 0.0
    %207 = vmatprep.subr.mxu0 0.0
    %208 = vmatpush1.msra.mxu0 0.0
    %209 = vmatprep.subr.mxu0 0.0
    %210 = vmatpush1.msra.mxu0 0.0
    %211 = vmatprep.subr.mxu0 0.0
    %212 = vmatpush1.msra.mxu0 0.0
    %213 = vmatprep.subr.mxu0 0.0
    %214 = vmatpush1.msra.mxu0 0.0
    %215 = vmatprep.subr.mxu0 0.0
    %216 = vmatpush1.msra.mxu0 0.0
    %217 = vmatprep.subr.mxu0 0.0
    %218 = vmatpush1.msra.mxu0 0.0
    %219 = vmatprep.subr.mxu0 0.0
    %220 = vmatpush1.msra.mxu0 0.0
    %221 = vmatprep.subr.mxu0 0.0
    %222 = vmatpush1.msra.mxu0 0.0
    %223 = vmatprep.subr.mxu0 0.0
    %224 = vmatpush1.msra.mxu0 0.0
    %225 = vmatprep.subr.mxu0 0.0
    %226 = vmatpush1.msra.mxu0 0.0
    %227 = vmatprep.subr.mxu0 0.0
    %228 = vmatpush1.msra.mxu0 0.0
    %229 = vmatprep.subr.mxu0 0.0
    %230 = vmatpush1.msra.mxu0 0.0
    %231 = vmatprep.subr.mxu0 0.0
    %232 = vmatpush1.msra.mxu0 0.0
    %233 = vmatprep.subr.mxu0 0.0
    %234 = vmatpush1.msra.mxu0 0.0
    %235 = vmatprep.subr.mxu0 0.0
    %236 = vmatpush1.msra.mxu0 0.0
    %237 = vmatprep.subr.mxu0 0.0
    %238 = vmatpush1.msra.mxu0 0.0
    %239 = vmatprep.subr.mxu0 0.0
    %240 = vmatpush1.msra.mxu0 0.0
    %241 = vmatprep.subr.mxu0 0.0
    %242 = vmatpush1.msra.mxu0 0.0
    %243 = vmatprep.subr.mxu0 0.0
    %244 = vmatpush1.msra.mxu0 0.0
    %245 = vmatprep.mubr.f32.mxu0 0.0
    %246 = vmatmul.mubr.f32.gmra.mrb[0].mxu0 %v108
    %v247 = vpop.f32.mrb[0].mxu0
    %v248 = vadd.f32 %v97, %v247
    %v249 = vpop.f32.mrb[0].mxu0
    %v250 = vadd.f32 %v101, %v249
    %251 = vdwg.mxu0
    %vm252 = vcmp.gt.f32.partialorder %v177, 0.0
    %vm253 = vcmp.gt.f32.partialorder %v179, 0.0
    %vm254 = vcmp.gt.f32.partialorder %v248, 0.0
    %vm255 = vcmp.gt.f32.partialorder %v250, 0.0
    %v256 = vmul.f32 %v177, 0.2
    %v257 = vmul.f32 %v179, 0.2
    %v258 = vmul.f32 %v248, 0.2
    %v259 = vmul.f32 %v250, 0.2
    %v260 = vsel %vm252, %v177, %v256
    %v261 = vsel %vm253, %v179, %v257
    %v262 = vsel %vm254, %v248, %v258
    %v263 = vsel %vm255, %v250, %v259
    %v264 = vld [vmem:[#allocation4] sm:$0xff]
    %v265 = vld [vmem:[#allocation4 + $0x8] sm:$0xff]
    %v266 = vld [vmem:[#allocation4 + $0x10] sm:$0xff]
    %v267 = vld [vmem:[#allocation4 + $0x18] sm:$0xff]
    %v268 = vld [vmem:[#allocation4 + $0x20] sm:$0xff]
    %v269 = vld [vmem:[#allocation4 + $0x28] sm:$0xff]
    %v270 = vld [vmem:[#allocation4 + $0x30] sm:$0xff]
    %v271 = vld [vmem:[#allocation4 + $0x38] sm:$0xff]
    %v272 = vld [vmem:[#allocation4 + $0x40] sm:$0xff]
    %v273 = vld [vmem:[#allocation4 + $0x48] sm:$0xff]
    %v274 = vld [vmem:[#allocation4 + $0x50] sm:$0xff]
    %v275 = vld [vmem:[#allocation4 + $0x58] sm:$0xff]
    %v276 = vld [vmem:[#allocation4 + $0x60] sm:$0xff]
    %v277 = vld [vmem:[#allocation4 + $0x68] sm:$0xff]
    %v278 = vld [vmem:[#allocation4 + $0x70] sm:$0xff]
    %v279 = vld [vmem:[#allocation4 + $0x78] sm:$0xff]
    %v280 = vld [vmem:[#allocation4 + $0x80] sm:$0xff]
    %v281 = vld [vmem:[#allocation4 + $0x88] sm:$0xff]
    %v282 = vld [vmem:[#allocation4 + $0x90] sm:$0xff]
    %v283 = vld [vmem:[#allocation4 + $0x98] sm:$0xff]
    %v284 = vld [vmem:[#allocation4 + $0xa0] sm:$0xff]
    %v285 = vld [vmem:[#allocation4 + $0xa8] sm:$0xff]
    %v286 = vld [vmem:[#allocation4 + $0xb0] sm:$0xff]
    %v287 = vld [vmem:[#allocation4 + $0xb8] sm:$0xff]
    %v288 = vld [vmem:[#allocation4 + $0xc0] sm:$0xff]
    %v289 = vld [vmem:[#allocation4 + $0xc8] sm:$0xff]
    %v290 = vld [vmem:[#allocation4 + $0xd0] sm:$0xff]
    %v291 = vld [vmem:[#allocation4 + $0xd8] sm:$0xff]
    %v292 = vld [vmem:[#allocation4 + $0xe0] sm:$0xff]
    %v293 = vld [vmem:[#allocation4 + $0xe8] sm:$0xff]
    %v294 = vld [vmem:[#allocation4 + $0xf0] sm:$0xff]
    %v295 = vld [vmem:[#allocation4 + $0xf8] sm:$0xff]
    %v296 = vld [vmem:[#allocation4 + $0x100] sm:$0xff]
    %v297 = vld [vmem:[#allocation4 + $0x108] sm:$0xff]
    %v298 = vld [vmem:[#allocation4 + $0x110] sm:$0xff]
    %v299 = vld [vmem:[#allocation4 + $0x118] sm:$0xff]
    %v300 = vld [vmem:[#allocation4 + $0x120] sm:$0xff]
    %v301 = vld [vmem:[#allocation4 + $0x128] sm:$0xff]
    %v302 = vld [vmem:[#allocation4 + $0x130] sm:$0xff]
    %v303 = vld [vmem:[#allocation4 + $0x138] sm:$0xff]
    %v304 = vld [vmem:[#allocation4 + $0x140] sm:$0xff]
    %v305 = vld [vmem:[#allocation4 + $0x148] sm:$0xff]
    %v306 = vld [vmem:[#allocation4 + $0x150] sm:$0xff]
    %v307 = vld [vmem:[#allocation4 + $0x158] sm:$0xff]
    %v308 = vld [vmem:[#allocation4 + $0x160] sm:$0xff]
    %v309 = vld [vmem:[#allocation4 + $0x168] sm:$0xff]
    %v310 = vld [vmem:[#allocation4 + $0x170] sm:$0xff]
    %v311 = vld [vmem:[#allocation4 + $0x178] sm:$0xff]
    %v312 = vld [vmem:[#allocation4 + $0x180] sm:$0xff]
    %v313 = vld [vmem:[#allocation4 + $0x188] sm:$0xff]
    %v314 = vld [vmem:[#allocation4 + $0x190] sm:$0xff]
    %v315 = vld [vmem:[#allocation4 + $0x198] sm:$0xff]
    %v316 = vld [vmem:[#allocation4 + $0x1a0] sm:$0xff]
    %v317 = vld [vmem:[#allocation4 + $0x1a8] sm:$0xff]
    %v318 = vld [vmem:[#allocation4 + $0x1b0] sm:$0xff]
    %v319 = vld [vmem:[#allocation4 + $0x1b8] sm:$0xff]
    %v320 = vld [vmem:[#allocation4 + $0x1c0] sm:$0xff]
    %v321 = vld [vmem:[#allocation4 + $0x1c8] sm:$0xff]
    %v322 = vld [vmem:[#allocation4 + $0x1d0] sm:$0xff]
    %v323 = vld [vmem:[#allocation4 + $0x1d8] sm:$0xff]
    %v324 = vld [vmem:[#allocation4 + $0x1e0] sm:$0xff]
    %v325 = vld [vmem:[#allocation4 + $0x1e8] sm:$0xff]
    %v326 = vld [vmem:[#allocation4 + $0x1f0] sm:$0xff]
    %v327 = vld [vmem:[#allocation4 + $0x1f8] sm:$0xff]
    %v328 = vld [vmem:[#allocation4 + $0x200] sm:$0xff]
    %v329 = vld [vmem:[#allocation4 + $0x208] sm:$0xff]
    %v330 = vld [vmem:[#allocation4 + $0x210] sm:$0xff]
    %v331 = vld [vmem:[#allocation4 + $0x218] sm:$0xff]
    %v332 = vld [vmem:[#allocation4 + $0x220] sm:$0xff]
    %v333 = vld [vmem:[#allocation4 + $0x228] sm:$0xff]
    %v334 = vld [vmem:[#allocation4 + $0x230] sm:$0xff]
    %v335 = vld [vmem:[#allocation4 + $0x238] sm:$0xff]
    %v336 = vld [vmem:[#allocation4 + $0x240] sm:$0xff]
    %v337 = vld [vmem:[#allocation4 + $0x248] sm:$0xff]
    %v338 = vld [vmem:[#allocation4 + $0x250] sm:$0xff]
    %v339 = vld [vmem:[#allocation4 + $0x258] sm:$0xff]
    %v340 = vld [vmem:[#allocation4 + $0x260] sm:$0xff]
    %v341 = vld [vmem:[#allocation4 + $0x268] sm:$0xff]
    %v342 = vld [vmem:[#allocation4 + $0x270] sm:$0xff]
    %v343 = vld [vmem:[#allocation4 + $0x278] sm:$0xff]
    %v344 = vld [vmem:[#allocation4 + $0x280] sm:$0xff]
    %v345 = vld [vmem:[#allocation4 + $0x288] sm:$0xff]
    %v346 = vld [vmem:[#allocation4 + $0x290] sm:$0xff]
    %v347 = vld [vmem:[#allocation4 + $0x298] sm:$0xff]
    %v348 = vld [vmem:[#allocation4 + $0x2a0] sm:$0xff]
    %v349 = vld [vmem:[#allocation4 + $0x2a8] sm:$0xff]
    %v350 = vld [vmem:[#allocation4 + $0x2b0] sm:$0xff]
    %v351 = vld [vmem:[#allocation4 + $0x2b8] sm:$0xff]
    %v352 = vld [vmem:[#allocation4 + $0x2c0] sm:$0xff]
    %v353 = vld [vmem:[#allocation4 + $0x2c8] sm:$0xff]
    %v354 = vld [vmem:[#allocation4 + $0x2d0] sm:$0xff]
    %v355 = vld [vmem:[#allocation4 + $0x2d8] sm:$0xff]
    %v356 = vld [vmem:[#allocation4 + $0x2e0] sm:$0xff]
    %v357 = vld [vmem:[#allocation4 + $0x2e8] sm:$0xff]
    %v358 = vld [vmem:[#allocation4 + $0x2f0] sm:$0xff]
    %v359 = vld [vmem:[#allocation4 + $0x2f8] sm:$0xff]
    %v360 = vld [vmem:[#allocation4 + $0x300] sm:$0xff]
    %v361 = vld [vmem:[#allocation4 + $0x308] sm:$0xff]
    %v362 = vld [vmem:[#allocation4 + $0x310] sm:$0xff]
    %v363 = vld [vmem:[#allocation4 + $0x318] sm:$0xff]
    %v364 = vld [vmem:[#allocation4 + $0x320] sm:$0xff]
    %v365 = vld [vmem:[#allocation4 + $0x328] sm:$0xff]
    %v366 = vld [vmem:[#allocation4 + $0x330] sm:$0xff]
    %v367 = vld [vmem:[#allocation4 + $0x338] sm:$0xff]
    %v368 = vld [vmem:[#allocation4 + $0x340] sm:$0xff]
    %v369 = vld [vmem:[#allocation4 + $0x348] sm:$0xff]
    %v370 = vld [vmem:[#allocation4 + $0x350] sm:$0xff]
    %v371 = vld [vmem:[#allocation4 + $0x358] sm:$0xff]
    %v372 = vld [vmem:[#allocation4 + $0x360] sm:$0xff]
    %v373 = vld [vmem:[#allocation4 + $0x368] sm:$0xff]
    %v374 = vld [vmem:[#allocation4 + $0x370] sm:$0xff]
    %v375 = vld [vmem:[#allocation4 + $0x378] sm:$0xff]
    %v376 = vld [vmem:[#allocation4 + $0x380] sm:$0xff]
    %v377 = vld [vmem:[#allocation4 + $0x388] sm:$0xff]
    %v378 = vld [vmem:[#allocation4 + $0x390] sm:$0xff]
    %v379 = vld [vmem:[#allocation4 + $0x398] sm:$0xff]
    %v380 = vld [vmem:[#allocation4 + $0x3a0] sm:$0xff]
    %v381 = vld [vmem:[#allocation4 + $0x3a8] sm:$0xff]
    %v382 = vld [vmem:[#allocation4 + $0x3b0] sm:$0xff]
    %v383 = vld [vmem:[#allocation4 + $0x3b8] sm:$0xff]
    %v384 = vld [vmem:[#allocation4 + $0x3c0] sm:$0xff]
    %v385 = vld [vmem:[#allocation4 + $0x3c8] sm:$0xff]
    %v386 = vld [vmem:[#allocation4 + $0x3d0] sm:$0xff]
    %v387 = vld [vmem:[#allocation4 + $0x3d8] sm:$0xff]
    %v388 = vld [vmem:[#allocation4 + $0x3e0] sm:$0xff]
    %v389 = vld [vmem:[#allocation4 + $0x3e8] sm:$0xff]
    %v390 = vld [vmem:[#allocation4 + $0x3f0] sm:$0xff]
    %v391 = vld [vmem:[#allocation4 + $0x3f8] sm:$0xff]
    %v392 = vld [vmem:[#allocation4 + $0x400] sm:$0xff]
    %v393 = vld [vmem:[#allocation4 + $0x408] sm:$0xff]
    %v394 = vld [vmem:[#allocation4 + $0x410] sm:$0xff]
    %v395 = vld [vmem:[#allocation4 + $0x418] sm:$0xff]
    %v396 = vld [vmem:[#allocation4 + $0x420] sm:$0xff]
    %v397 = vld [vmem:[#allocation4 + $0x428] sm:$0xff]
    %v398 = vld [vmem:[#allocation4 + $0x430] sm:$0xff]
    %v399 = vld [vmem:[#allocation4 + $0x438] sm:$0xff]
    %v400 = vld [vmem:[#allocation4 + $0x440] sm:$0xff]
    %v401 = vld [vmem:[#allocation4 + $0x448] sm:$0xff]
    %v402 = vld [vmem:[#allocation4 + $0x450] sm:$0xff]
    %v403 = vld [vmem:[#allocation4 + $0x458] sm:$0xff]
    %v404 = vld [vmem:[#allocation4 + $0x460] sm:$0xff]
    %v405 = vld [vmem:[#allocation4 + $0x468] sm:$0xff]
    %v406 = vld [vmem:[#allocation4 + $0x470] sm:$0xff]
    %v407 = vld [vmem:[#allocation4 + $0x478] sm:$0xff]
    %v408 = vld [vmem:[#allocation4 + $0x480] sm:$0xff]
    %v409 = vld [vmem:[#allocation4 + $0x488] sm:$0xff]
    %v410 = vld [vmem:[#allocation4 + $0x490] sm:$0xff]
    %v411 = vld [vmem:[#allocation4 + $0x498] sm:$0xff]
    %v412 = vld [vmem:[#allocation4 + $0x4a0] sm:$0xff]
    %v413 = vld [vmem:[#allocation4 + $0x4a8] sm:$0xff]
    %v414 = vld [vmem:[#allocation4 + $0x4b0] sm:$0xff]
    %v415 = vld [vmem:[#allocation4 + $0x4b8] sm:$0xff]
    %v416 = vld [vmem:[#allocation4 + $0x4c0] sm:$0xff]
    %v417 = vld [vmem:[#allocation4 + $0x4c8] sm:$0xff]
    %v418 = vld [vmem:[#allocation4 + $0x4d0] sm:$0xff]
    %v419 = vld [vmem:[#allocation4 + $0x4d8] sm:$0xff]
    %v420 = vld [vmem:[#allocation4 + $0x4e0] sm:$0xff]
    %v421 = vld [vmem:[#allocation4 + $0x4e8] sm:$0xff]
    %v422 = vld [vmem:[#allocation4 + $0x4f0] sm:$0xff]
    %v423 = vld [vmem:[#allocation4 + $0x4f8] sm:$0xff]
    %v424 = vld [vmem:[#allocation4 + $0x500] sm:$0xff]
    %v425 = vld [vmem:[#allocation4 + $0x508] sm:$0xff]
    %v426 = vld [vmem:[#allocation4 + $0x510] sm:$0xff]
    %v427 = vld [vmem:[#allocation4 + $0x518] sm:$0xff]
    %v428 = vld [vmem:[#allocation4 + $0x520] sm:$0xff]
    %v429 = vld [vmem:[#allocation4 + $0x528] sm:$0xff]
    %v430 = vld [vmem:[#allocation4 + $0x530] sm:$0xff]
    %v431 = vld [vmem:[#allocation4 + $0x538] sm:$0xff]
    %v432 = vld [vmem:[#allocation4 + $0x540] sm:$0xff]
    %v433 = vld [vmem:[#allocation4 + $0x548] sm:$0xff]
    %v434 = vld [vmem:[#allocation4 + $0x550] sm:$0xff]
    %v435 = vld [vmem:[#allocation4 + $0x558] sm:$0xff]
    %v436 = vld [vmem:[#allocation4 + $0x560] sm:$0xff]
    %v437 = vld [vmem:[#allocation4 + $0x568] sm:$0xff]
    %v438 = vld [vmem:[#allocation4 + $0x570] sm:$0xff]
    %v439 = vld [vmem:[#allocation4 + $0x578] sm:$0xff]
    %v440 = vld [vmem:[#allocation4 + $0x580] sm:$0xff]
    %v441 = vld [vmem:[#allocation4 + $0x588] sm:$0xff]
    %v442 = vld [vmem:[#allocation4 + $0x590] sm:$0xff]
    %v443 = vld [vmem:[#allocation4 + $0x598] sm:$0xff]
    %v444 = vld [vmem:[#allocation4 + $0x5a0] sm:$0xff]
    %v445 = vld [vmem:[#allocation4 + $0x5a8] sm:$0xff]
    %v446 = vld [vmem:[#allocation4 + $0x5b0] sm:$0xff]
    %v447 = vld [vmem:[#allocation4 + $0x5b8] sm:$0xff]
    %v448 = vld [vmem:[#allocation4 + $0x5c0] sm:$0xff]
    %v449 = vld [vmem:[#allocation4 + $0x5c8] sm:$0xff]
    %v450 = vld [vmem:[#allocation4 + $0x5d0] sm:$0xff]
    %v451 = vld [vmem:[#allocation4 + $0x5d8] sm:$0xff]
    %v452 = vld [vmem:[#allocation4 + $0x5e0] sm:$0xff]
    %v453 = vld [vmem:[#allocation4 + $0x5e8] sm:$0xff]
    %v454 = vld [vmem:[#allocation4 + $0x5f0] sm:$0xff]
    %v455 = vld [vmem:[#allocation4 + $0x5f8] sm:$0xff]
    %v456 = vld [vmem:[#allocation4 + $0x600] sm:$0xff]
    %v457 = vld [vmem:[#allocation4 + $0x608] sm:$0xff]
    %v458 = vld [vmem:[#allocation4 + $0x610] sm:$0xff]
    %v459 = vld [vmem:[#allocation4 + $0x618] sm:$0xff]
    %v460 = vld [vmem:[#allocation4 + $0x620] sm:$0xff]
    %v461 = vld [vmem:[#allocation4 + $0x628] sm:$0xff]
    %v462 = vld [vmem:[#allocation4 + $0x630] sm:$0xff]
    %v463 = vld [vmem:[#allocation4 + $0x638] sm:$0xff]
    %v464 = vld [vmem:[#allocation4 + $0x640] sm:$0xff]
    %v465 = vld [vmem:[#allocation4 + $0x648] sm:$0xff]
    %v466 = vld [vmem:[#allocation4 + $0x650] sm:$0xff]
    %v467 = vld [vmem:[#allocation4 + $0x658] sm:$0xff]
    %v468 = vld [vmem:[#allocation4 + $0x660] sm:$0xff]
    %v469 = vld [vmem:[#allocation4 + $0x668] sm:$0xff]
    %v470 = vld [vmem:[#allocation4 + $0x670] sm:$0xff]
    %v471 = vld [vmem:[#allocation4 + $0x678] sm:$0xff]
    %v472 = vld [vmem:[#allocation4 + $0x680] sm:$0xff]
    %v473 = vld [vmem:[#allocation4 + $0x688] sm:$0xff]
    %v474 = vld [vmem:[#allocation4 + $0x690] sm:$0xff]
    %v475 = vld [vmem:[#allocation4 + $0x698] sm:$0xff]
    %v476 = vld [vmem:[#allocation4 + $0x6a0] sm:$0xff]
    %v477 = vld [vmem:[#allocation4 + $0x6a8] sm:$0xff]
    %v478 = vld [vmem:[#allocation4 + $0x6b0] sm:$0xff]
    %v479 = vld [vmem:[#allocation4 + $0x6b8] sm:$0xff]
    %v480 = vld [vmem:[#allocation4 + $0x6c0] sm:$0xff]
    %v481 = vld [vmem:[#allocation4 + $0x6c8] sm:$0xff]
    %v482 = vld [vmem:[#allocation4 + $0x6d0] sm:$0xff]
    %v483 = vld [vmem:[#allocation4 + $0x6d8] sm:$0xff]
    %v484 = vld [vmem:[#allocation4 + $0x6e0] sm:$0xff]
    %v485 = vld [vmem:[#allocation4 + $0x6e8] sm:$0xff]
    %v486 = vld [vmem:[#allocation4 + $0x6f0] sm:$0xff]
    %v487 = vld [vmem:[#allocation4 + $0x6f8] sm:$0xff]
    %v488 = vld [vmem:[#allocation4 + $0x700] sm:$0xff]
    %v489 = vld [vmem:[#allocation4 + $0x708] sm:$0xff]
    %v490 = vld [vmem:[#allocation4 + $0x710] sm:$0xff]
    %v491 = vld [vmem:[#allocation4 + $0x718] sm:$0xff]
    %v492 = vld [vmem:[#allocation4 + $0x720] sm:$0xff]
    %v493 = vld [vmem:[#allocation4 + $0x728] sm:$0xff]
    %v494 = vld [vmem:[#allocation4 + $0x730] sm:$0xff]
    %v495 = vld [vmem:[#allocation4 + $0x738] sm:$0xff]
    %v496 = vld [vmem:[#allocation4 + $0x740] sm:$0xff]
    %v497 = vld [vmem:[#allocation4 + $0x748] sm:$0xff]
    %v498 = vld [vmem:[#allocation4 + $0x750] sm:$0xff]
    %v499 = vld [vmem:[#allocation4 + $0x758] sm:$0xff]
    %v500 = vld [vmem:[#allocation4 + $0x760] sm:$0xff]
    %v501 = vld [vmem:[#allocation4 + $0x768] sm:$0xff]
    %v502 = vld [vmem:[#allocation4 + $0x770] sm:$0xff]
    %v503 = vld [vmem:[#allocation4 + $0x778] sm:$0xff]
    %v504 = vld [vmem:[#allocation4 + $0x780] sm:$0xff]
    %v505 = vld [vmem:[#allocation4 + $0x788] sm:$0xff]
    %v506 = vld [vmem:[#allocation4 + $0x790] sm:$0xff]
    %v507 = vld [vmem:[#allocation4 + $0x798] sm:$0xff]
    %v508 = vld [vmem:[#allocation4 + $0x7a0] sm:$0xff]
    %v509 = vld [vmem:[#allocation4 + $0x7a8] sm:$0xff]
    %v510 = vld [vmem:[#allocation4 + $0x7b0] sm:$0xff]
    %v511 = vld [vmem:[#allocation4 + $0x7b8] sm:$0xff]
    %v512 = vld [vmem:[#allocation4 + $0x7c0] sm:$0xff]
    %v513 = vld [vmem:[#allocation4 + $0x7c8] sm:$0xff]
    %v514 = vld [vmem:[#allocation4 + $0x7d0] sm:$0xff]
    %v515 = vld [vmem:[#allocation4 + $0x7d8] sm:$0xff]
    %v516 = vld [vmem:[#allocation4 + $0x7e0] sm:$0xff]
    %v517 = vld [vmem:[#allocation4 + $0x7e8] sm:$0xff]
    %v518 = vld [vmem:[#allocation4 + $0x7f0] sm:$0xff]
    %v519 = vld [vmem:[#allocation4 + $0x7f8] sm:$0xff]
    %v520 = vld [vmem:[%s4] sm:$0xf]
    %v522 = vlaneseq
    %v523 = vshrl.u32 %v522, 7
    %v524 = vsub.s32 0, %v523
    %v525 = vrot.slane %v520, %v524
    %v526 = vlaneseq
    %v527 = vshrl.u32 %v526, 7
    %v528 = vsub.s32 1, %v527
    %v529 = vrot.slane %v520, %v528
    %v530 = vlaneseq
    %v531 = vshrl.u32 %v530, 7
    %v532 = vsub.s32 2, %v531
    %v533 = vrot.slane %v520, %v532
    %v534 = vlaneseq
    %v535 = vshrl.u32 %v534, 7
    %v536 = vsub.s32 3, %v535
    %v537 = vrot.slane %v520, %v536
    %542 = vmatprep.subr.mxu0 %v265
    %543 = vmatpush1.msra.mxu0 %v264
    %544 = vmatprep.subr.mxu0 %v269
    %545 = vmatpush1.msra.mxu0 %v268
    %546 = vmatprep.subr.mxu0 %v273
    %547 = vmatpush1.msra.mxu0 %v272
    %548 = vmatprep.subr.mxu0 %v277
    %549 = vmatpush1.msra.mxu0 %v276
    %550 = vmatprep.subr.mxu0 %v281
    %551 = vmatpush1.msra.mxu0 %v280
    %552 = vmatprep.subr.mxu0 %v285
    %553 = vmatpush1.msra.mxu0 %v284
    %554 = vmatprep.subr.mxu0 %v289
    %555 = vmatpush1.msra.mxu0 %v288
    %556 = vmatprep.subr.mxu0 %v293
    %557 = vmatpush1.msra.mxu0 %v292
    %558 = vmatprep.subr.mxu0 %v297
    %559 = vmatpush1.msra.mxu0 %v296
    %560 = vmatprep.subr.mxu0 %v301
    %561 = vmatpush1.msra.mxu0 %v300
    %562 = vmatprep.subr.mxu0 %v305
    %563 = vmatpush1.msra.mxu0 %v304
    %564 = vmatprep.subr.mxu0 %v309
    %565 = vmatpush1.msra.mxu0 %v308
    %566 = vmatprep.subr.mxu0 %v313
    %567 = vmatpush1.msra.mxu0 %v312
    %568 = vmatprep.subr.mxu0 %v317
    %569 = vmatpush1.msra.mxu0 %v316
    %570 = vmatprep.subr.mxu0 %v321
    %571 = vmatpush1.msra.mxu0 %v320
    %572 = vmatprep.subr.mxu0 %v325
    %573 = vmatpush1.msra.mxu0 %v324
    %574 = vmatprep.subr.mxu0 %v329
    %575 = vmatpush1.msra.mxu0 %v328
    %576 = vmatprep.subr.mxu0 %v333
    %577 = vmatpush1.msra.mxu0 %v332
    %578 = vmatprep.subr.mxu0 %v337
    %579 = vmatpush1.msra.mxu0 %v336
    %580 = vmatprep.subr.mxu0 %v341
    %581 = vmatpush1.msra.mxu0 %v340
    %582 = vmatprep.subr.mxu0 %v345
    %583 = vmatpush1.msra.mxu0 %v344
    %584 = vmatprep.subr.mxu0 %v349
    %585 = vmatpush1.msra.mxu0 %v348
    %586 = vmatprep.subr.mxu0 %v353
    %587 = vmatpush1.msra.mxu0 %v352
    %588 = vmatprep.subr.mxu0 %v357
    %589 = vmatpush1.msra.mxu0 %v356
    %590 = vmatprep.subr.mxu0 %v361
    %591 = vmatpush1.msra.mxu0 %v360
    %592 = vmatprep.subr.mxu0 %v365
    %593 = vmatpush1.msra.mxu0 %v364
    %594 = vmatprep.subr.mxu0 %v369
    %595 = vmatpush1.msra.mxu0 %v368
    %596 = vmatprep.subr.mxu0 %v373
    %597 = vmatpush1.msra.mxu0 %v372
    %598 = vmatprep.subr.mxu0 %v377
    %599 = vmatpush1.msra.mxu0 %v376
    %600 = vmatprep.subr.mxu0 %v381
    %601 = vmatpush1.msra.mxu0 %v380
    %602 = vmatprep.subr.mxu0 %v385
    %603 = vmatpush1.msra.mxu0 %v384
    %604 = vmatprep.subr.mxu0 %v389
    %605 = vmatpush1.msra.mxu0 %v388
    %606 = vmatprep.mubr.f32.mxu0 %v261
    %607 = vmatmul.mubr.f32.gmra.mrb[0].mxu0 %v260
    %v608 = vpop.f32.mrb[0].mxu0
    %v609 = vadd.f32 %v525, %v608
    %v610 = vpop.f32.mrb[0].mxu0
    %v611 = vadd.f32 %v529, %v610
    %612 = vdwg.mxu0
    %613 = vmatprep.subr.mxu0 %v393
    %614 = vmatpush1.msra.mxu0 %v392
    %615 = vmatprep.subr.mxu0 %v397
    %616 = vmatpush1.msra.mxu0 %v396
    %617 = vmatprep.subr.mxu0 %v401
    %618 = vmatpush1.msra.mxu0 %v400
    %619 = vmatprep.subr.mxu0 %v405
    %620 = vmatpush1.msra.mxu0 %v404
    %621 = vmatprep.subr.mxu0 %v409
    %622 = vmatpush1.msra.mxu0 %v408
    %623 = vmatprep.subr.mxu0 %v413
    %624 = vmatpush1.msra.mxu0 %v412
    %625 = vmatprep.subr.mxu0 %v417
    %626 = vmatpush1.msra.mxu0 %v416
    %627 = vmatprep.subr.mxu0 %v421
    %628 = vmatpush1.msra.mxu0 %v420
    %629 = vmatprep.subr.mxu0 %v425
    %630 = vmatpush1.msra.mxu0 %v424
    %631 = vmatprep.subr.mxu0 %v429
    %632 = vmatpush1.msra.mxu0 %v428
    %633 = vmatprep.subr.mxu0 %v433
    %634 = vmatpush1.msra.mxu0 %v432
    %635 = vmatprep.subr.mxu0 %v437
    %636 = vmatpush1.msra.mxu0 %v436
    %637 = vmatprep.subr.mxu0 %v441
    %638 = vmatpush1.msra.mxu0 %v440
    %639 = vmatprep.subr.mxu0 %v445
    %640 = vmatpush1.msra.mxu0 %v444
    %641 = vmatprep.subr.mxu0 %v449
    %642 = vmatpush1.msra.mxu0 %v448
    %643 = vmatprep.subr.mxu0 %v453
    %644 = vmatpush1.msra.mxu0 %v452
    %645 = vmatprep.subr.mxu0 %v457
    %646 = vmatpush1.msra.mxu0 %v456
    %647 = vmatprep.subr.mxu0 %v461
    %648 = vmatpush1.msra.mxu0 %v460
    %649 = vmatprep.subr.mxu0 %v465
    %650 = vmatpush1.msra.mxu0 %v464
    %651 = vmatprep.subr.mxu0 %v469
    %652 = vmatpush1.msra.mxu0 %v468
    %653 = vmatprep.subr.mxu0 %v473
    %654 = vmatpush1.msra.mxu0 %v472
    %655 = vmatprep.subr.mxu0 %v477
    %656 = vmatpush1.msra.mxu0 %v476
    %657 = vmatprep.subr.mxu0 %v481
    %658 = vmatpush1.msra.mxu0 %v480
    %659 = vmatprep.subr.mxu0 %v485
    %660 = vmatpush1.msra.mxu0 %v484
    %661 = vmatprep.subr.mxu0 %v489
    %662 = vmatpush1.msra.mxu0 %v488
    %663 = vmatprep.subr.mxu0 %v493
    %664 = vmatpush1.msra.mxu0 %v492
    %665 = vmatprep.subr.mxu0 %v497
    %666 = vmatpush1.msra.mxu0 %v496
    %667 = vmatprep.subr.mxu0 %v501
    %668 = vmatpush1.msra.mxu0 %v500
    %669 = vmatprep.subr.mxu0 %v505
    %670 = vmatpush1.msra.mxu0 %v504
    %671 = vmatprep.subr.mxu0 %v509
    %672 = vmatpush1.msra.mxu0 %v508
    %673 = vmatprep.subr.mxu0 %v513
    %674 = vmatpush1.msra.mxu0 %v512
    %675 = vmatprep.subr.mxu0 %v517
    %676 = vmatpush1.msra.mxu0 %v516
    %677 = vmatprep.mubr.f32.mxu0 %v263
    %678 = vmatmul.mubr.f32.gmra.mrb[0].mxu0 %v262
    %v679 = vpop.f32.mrb[0].mxu0
    %v680 = vadd.f32 %v609, %v679
    %v681 = vpop.f32.mrb[0].mxu0
    %v682 = vadd.f32 %v611, %v681
    %683 = vdwg.mxu0
    %684 = vmatprep.subr.mxu0 %v267
    %685 = vmatpush1.msra.mxu0 %v266
    %686 = vmatprep.subr.mxu0 %v271
    %687 = vmatpush1.msra.mxu0 %v270
    %688 = vmatprep.subr.mxu0 %v275
    %689 = vmatpush1.msra.mxu0 %v274
    %690 = vmatprep.subr.mxu0 %v279
    %691 = vmatpush1.msra.mxu0 %v278
    %692 = vmatprep.subr.mxu0 %v283
    %693 = vmatpush1.msra.mxu0 %v282
    %694 = vmatprep.subr.mxu0 %v287
    %695 = vmatpush1.msra.mxu0 %v286
    %696 = vmatprep.subr.mxu0 %v291
    %697 = vmatpush1.msra.mxu0 %v290
    %698 = vmatprep.subr.mxu0 %v295
    %699 = vmatpush1.msra.mxu0 %v294
    %700 = vmatprep.subr.mxu0 %v299
    %701 = vmatpush1.msra.mxu0 %v298
    %702 = vmatprep.subr.mxu0 %v303
    %703 = vmatpush1.msra.mxu0 %v302
    %704 = vmatprep.subr.mxu0 %v307
    %705 = vmatpush1.msra.mxu0 %v306
    %706 = vmatprep.subr.mxu0 %v311
    %707 = vmatpush1.msra.mxu0 %v310
    %708 = vmatprep.subr.mxu0 %v315
    %709 = vmatpush1.msra.mxu0 %v314
    %710 = vmatprep.subr.mxu0 %v319
    %711 = vmatpush1.msra.mxu0 %v318
    %712 = vmatprep.subr.mxu0 %v323
    %713 = vmatpush1.msra.mxu0 %v322
    %714 = vmatprep.subr.mxu0 %v327
    %715 = vmatpush1.msra.mxu0 %v326
    %716 = vmatprep.subr.mxu0 %v331
    %717 = vmatpush1.msra.mxu0 %v330
    %718 = vmatprep.subr.mxu0 %v335
    %719 = vmatpush1.msra.mxu0 %v334
    %720 = vmatprep.subr.mxu0 %v339
    %721 = vmatpush1.msra.mxu0 %v338
    %722 = vmatprep.subr.mxu0 %v343
    %723 = vmatpush1.msra.mxu0 %v342
    %724 = vmatprep.subr.mxu0 %v347
    %725 = vmatpush1.msra.mxu0 %v346
    %726 = vmatprep.subr.mxu0 %v351
    %727 = vmatpush1.msra.mxu0 %v350
    %728 = vmatprep.subr.mxu0 %v355
    %729 = vmatpush1.msra.mxu0 %v354
    %730 = vmatprep.subr.mxu0 %v359
    %731 = vmatpush1.msra.mxu0 %v358
    %732 = vmatprep.subr.mxu0 %v363
    %733 = vmatpush1.msra.mxu0 %v362
    %734 = vmatprep.subr.mxu0 %v367
    %735 = vmatpush1.msra.mxu0 %v366
    %736 = vmatprep.subr.mxu0 %v371
    %737 = vmatpush1.msra.mxu0 %v370
    %738 = vmatprep.subr.mxu0 %v375
    %739 = vmatpush1.msra.mxu0 %v374
    %740 = vmatprep.subr.mxu0 %v379
    %741 = vmatpush1.msra.mxu0 %v378
    %742 = vmatprep.subr.mxu0 %v383
    %743 = vmatpush1.msra.mxu0 %v382
    %744 = vmatprep.subr.mxu0 %v387
    %745 = vmatpush1.msra.mxu0 %v386
    %746 = vmatprep.subr.mxu0 %v391
    %747 = vmatpush1.msra.mxu0 %v390
    %748 = vmatprep.mubr.f32.mxu0 %v261
    %749 = vmatmul.mubr.f32.gmra.mrb[0].mxu0 %v260
    %v750 = vpop.f32.mrb[0].mxu0
    %v751 = vadd.f32 %v533, %v750
    %v752 = vpop.f32.mrb[0].mxu0
    %v753 = vadd.f32 %v537, %v752
    %754 = vdwg.mxu0
    %755 = vmatprep.subr.mxu0 %v395
    %756 = vmatpush1.msra.mxu0 %v394
    %757 = vmatprep.subr.mxu0 %v399
    %758 = vmatpush1.msra.mxu0 %v398
    %759 = vmatprep.subr.mxu0 %v403
    %760 = vmatpush1.msra.mxu0 %v402
    %761 = vmatprep.subr.mxu0 %v407
    %762 = vmatpush1.msra.mxu0 %v406
    %763 = vmatprep.subr.mxu0 %v411
    %764 = vmatpush1.msra.mxu0 %v410
    %765 = vmatprep.subr.mxu0 %v415
    %766 = vmatpush1.msra.mxu0 %v414
    %767 = vmatprep.subr.mxu0 %v419
    %768 = vmatpush1.msra.mxu0 %v418
    %769 = vmatprep.subr.mxu0 %v423
    %770 = vmatpush1.msra.mxu0 %v422
    %771 = vmatprep.subr.mxu0 %v427
    %772 = vmatpush1.msra.mxu0 %v426
    %773 = vmatprep.subr.mxu0 %v431
    %774 = vmatpush1.msra.mxu0 %v430
    %775 = vmatprep.subr.mxu0 %v435
    %776 = vmatpush1.msra.mxu0 %v434
    %777 = vmatprep.subr.mxu0 %v439
    %778 = vmatpush1.msra.mxu0 %v438
    %779 = vmatprep.subr.mxu0 %v443
    %780 = vmatpush1.msra.mxu0 %v442
    %781 = vmatprep.subr.mxu0 %v447
    %782 = vmatpush1.msra.mxu0 %v446
    %783 = vmatprep.subr.mxu0 %v451
    %784 = vmatpush1.msra.mxu0 %v450
    %785 = vmatprep.subr.mxu0 %v455
    %786 = vmatpush1.msra.mxu0 %v454
    %787 = vmatprep.subr.mxu0 %v459
    %788 = vmatpush1.msra.mxu0 %v458
    %789 = vmatprep.subr.mxu0 %v463
    %790 = vmatpush1.msra.mxu0 %v462
    %791 = vmatprep.subr.mxu0 %v467
    %792 = vmatpush1.msra.mxu0 %v466
    %793 = vmatprep.subr.mxu0 %v471
    %794 = vmatpush1.msra.mxu0 %v470
    %795 = vmatprep.subr.mxu0 %v475
    %796 = vmatpush1.msra.mxu0 %v474
    %797 = vmatprep.subr.mxu0 %v479
    %798 = vmatpush1.msra.mxu0 %v478
    %799 = vmatprep.subr.mxu0 %v483
    %800 = vmatpush1.msra.mxu0 %v482
    %801 = vmatprep.subr.mxu0 %v487
    %802 = vmatpush1.msra.mxu0 %v486
    %803 = vmatprep.subr.mxu0 %v491
    %804 = vmatpush1.msra.mxu0 %v490
    %805 = vmatprep.subr.mxu0 %v495
    %806 = vmatpush1.msra.mxu0 %v494
    %807 = vmatprep.subr.mxu0 %v499
    %808 = vmatpush1.msra.mxu0 %v498
    %809 = vmatprep.subr.mxu0 %v503
    %810 = vmatpush1.msra.mxu0 %v502
    %811 = vmatprep.subr.mxu0 %v507
    %812 = vmatpush1.msra.mxu0 %v506
    %813 = vmatprep.subr.mxu0 %v511
    %814 = vmatpush1.msra.mxu0 %v510
    %815 = vmatprep.subr.mxu0 %v515
    %816 = vmatpush1.msra.mxu0 %v514
    %817 = vmatprep.subr.mxu0 %v519
    %818 = vmatpush1.msra.mxu0 %v518
    %819 = vmatprep.mubr.f32.mxu0 %v263
    %820 = vmatmul.mubr.f32.gmra.mrb[0].mxu0 %v262
    %v821 = vpop.f32.mrb[0].mxu0
    %v822 = vadd.f32 %v751, %v821
    %v823 = vpop.f32.mrb[0].mxu0
    %v824 = vadd.f32 %v753, %v823
    %825 = vdwg.mxu0
    %vm826 = vcmp.gt.f32.partialorder %v680, 0.0
    %vm827 = vcmp.gt.f32.partialorder %v682, 0.0
    %vm828 = vcmp.gt.f32.partialorder %v822, 0.0
    %vm829 = vcmp.gt.f32.partialorder %v824, 0.0
    %v830 = vmul.f32 %v680, 0.2
    %v831 = vmul.f32 %v682, 0.2
    %v832 = vmul.f32 %v822, 0.2
    %v833 = vmul.f32 %v824, 0.2
    %v834 = vsel %vm826, %v680, %v830
    %v835 = vsel %vm827, %v682, %v831
    %v836 = vsel %vm828, %v822, %v832
    %v837 = vsel %vm829, %v824, %v833
    %v838 = vld [vmem:[#allocation6] sm:$0xff]
    %v839 = vld [vmem:[#allocation6 + $0x8] sm:$0xff]
    %v840 = vld [vmem:[#allocation6 + $0x10] sm:$0xff]
    %v841 = vld [vmem:[#allocation6 + $0x18] sm:$0xff]
    %v842 = vld [vmem:[#allocation6 + $0x20] sm:$0xff]
    %v843 = vld [vmem:[#allocation6 + $0x28] sm:$0xff]
    %v844 = vld [vmem:[#allocation6 + $0x30] sm:$0xff]
    %v845 = vld [vmem:[#allocation6 + $0x38] sm:$0xff]
    %v846 = vld [vmem:[#allocation6 + $0x40] sm:$0xff]
    %v847 = vld [vmem:[#allocation6 + $0x48] sm:$0xff]
    %v848 = vld [vmem:[#allocation6 + $0x50] sm:$0xff]
    %v849 = vld [vmem:[#allocation6 + $0x58] sm:$0xff]
    %v850 = vld [vmem:[#allocation6 + $0x60] sm:$0xff]
    %v851 = vld [vmem:[#allocation6 + $0x68] sm:$0xff]
    %v852 = vld [vmem:[#allocation6 + $0x70] sm:$0xff]
    %v853 = vld [vmem:[#allocation6 + $0x78] sm:$0xff]
    %v854 = vld [vmem:[#allocation6 + $0x80] sm:$0xff]
    %v855 = vld [vmem:[#allocation6 + $0x88] sm:$0xff]
    %v856 = vld [vmem:[#allocation6 + $0x90] sm:$0xff]
    %v857 = vld [vmem:[#allocation6 + $0x98] sm:$0xff]
    %v858 = vld [vmem:[#allocation6 + $0xa0] sm:$0xff]
    %v859 = vld [vmem:[#allocation6 + $0xa8] sm:$0xff]
    %v860 = vld [vmem:[#allocation6 + $0xb0] sm:$0xff]
    %v861 = vld [vmem:[#allocation6 + $0xb8] sm:$0xff]
    %v862 = vld [vmem:[#allocation6 + $0xc0] sm:$0xff]
    %v863 = vld [vmem:[#allocation6 + $0xc8] sm:$0xff]
    %v864 = vld [vmem:[#allocation6 + $0xd0] sm:$0xff]
    %v865 = vld [vmem:[#allocation6 + $0xd8] sm:$0xff]
    %v866 = vld [vmem:[#allocation6 + $0xe0] sm:$0xff]
    %v867 = vld [vmem:[#allocation6 + $0xe8] sm:$0xff]
    %v868 = vld [vmem:[#allocation6 + $0xf0] sm:$0xff]
    %v869 = vld [vmem:[#allocation6 + $0xf8] sm:$0xff]
    %v870 = vld [vmem:[#allocation6 + $0x100] sm:$0xff]
    %v871 = vld [vmem:[#allocation6 + $0x108] sm:$0xff]
    %v872 = vld [vmem:[#allocation6 + $0x110] sm:$0xff]
    %v873 = vld [vmem:[#allocation6 + $0x118] sm:$0xff]
    %v874 = vld [vmem:[#allocation6 + $0x120] sm:$0xff]
    %v875 = vld [vmem:[#allocation6 + $0x128] sm:$0xff]
    %v876 = vld [vmem:[#allocation6 + $0x130] sm:$0xff]
    %v877 = vld [vmem:[#allocation6 + $0x138] sm:$0xff]
    %v878 = vld [vmem:[#allocation6 + $0x140] sm:$0xff]
    %v879 = vld [vmem:[#allocation6 + $0x148] sm:$0xff]
    %v880 = vld [vmem:[#allocation6 + $0x150] sm:$0xff]
    %v881 = vld [vmem:[#allocation6 + $0x158] sm:$0xff]
    %v882 = vld [vmem:[#allocation6 + $0x160] sm:$0xff]
    %v883 = vld [vmem:[#allocation6 + $0x168] sm:$0xff]
    %v884 = vld [vmem:[#allocation6 + $0x170] sm:$0xff]
    %v885 = vld [vmem:[#allocation6 + $0x178] sm:$0xff]
    %v886 = vld [vmem:[#allocation6 + $0x180] sm:$0xff]
    %v887 = vld [vmem:[#allocation6 + $0x188] sm:$0xff]
    %v888 = vld [vmem:[#allocation6 + $0x190] sm:$0xff]
    %v889 = vld [vmem:[#allocation6 + $0x198] sm:$0xff]
    %v890 = vld [vmem:[#allocation6 + $0x1a0] sm:$0xff]
    %v891 = vld [vmem:[#allocation6 + $0x1a8] sm:$0xff]
    %v892 = vld [vmem:[#allocation6 + $0x1b0] sm:$0xff]
    %v893 = vld [vmem:[#allocation6 + $0x1b8] sm:$0xff]
    %v894 = vld [vmem:[#allocation6 + $0x1c0] sm:$0xff]
    %v895 = vld [vmem:[#allocation6 + $0x1c8] sm:$0xff]
    %v896 = vld [vmem:[#allocation6 + $0x1d0] sm:$0xff]
    %v897 = vld [vmem:[#allocation6 + $0x1d8] sm:$0xff]
    %v898 = vld [vmem:[#allocation6 + $0x1e0] sm:$0xff]
    %v899 = vld [vmem:[#allocation6 + $0x1e8] sm:$0xff]
    %v900 = vld [vmem:[#allocation6 + $0x1f0] sm:$0xff]
    %v901 = vld [vmem:[#allocation6 + $0x1f8] sm:$0xff]
    %v902 = vld [vmem:[%s6] sm:$0x1]
    %v904 = vlaneseq
    %v905 = vshrl.u32 %v904, 7
    %v906 = vsub.s32 0, %v905
    %v907 = vrot.slane %v902, %v906
    %909 = vmatprep.subr.mxu0 0.0
    %910 = vmatpush1.msra.mxu0 %v838
    %911 = vmatprep.subr.mxu0 0.0
    %912 = vmatpush1.msra.mxu0 %v839
    %913 = vmatprep.subr.mxu0 0.0
    %914 = vmatpush1.msra.mxu0 %v840
    %915 = vmatprep.subr.mxu0 0.0
    %916 = vmatpush1.msra.mxu0 %v841
    %917 = vmatprep.subr.mxu0 0.0
    %918 = vmatpush1.msra.mxu0 %v842
    %919 = vmatprep.subr.mxu0 0.0
    %920 = vmatpush1.msra.mxu0 %v843
    %921 = vmatprep.subr.mxu0 0.0
    %922 = vmatpush1.msra.mxu0 %v844
    %923 = vmatprep.subr.mxu0 0.0
    %924 = vmatpush1.msra.mxu0 %v845
    %925 = vmatprep.subr.mxu0 0.0
    %926 = vmatpush1.msra.mxu0 %v846
    %927 = vmatprep.subr.mxu0 0.0
    %928 = vmatpush1.msra.mxu0 %v847
    %929 = vmatprep.subr.mxu0 0.0
    %930 = vmatpush1.msra.mxu0 %v848
    %931 = vmatprep.subr.mxu0 0.0
    %932 = vmatpush1.msra.mxu0 %v849
    %933 = vmatprep.subr.mxu0 0.0
    %934 = vmatpush1.msra.mxu0 %v850
    %935 = vmatprep.subr.mxu0 0.0
    %936 = vmatpush1.msra.mxu0 %v851
    %937 = vmatprep.subr.mxu0 0.0
    %938 = vmatpush1.msra.mxu0 %v852
    %939 = vmatprep.subr.mxu0 0.0
    %940 = vmatpush1.msra.mxu0 %v853
    %941 = vmatprep.subr.mxu0 0.0
    %942 = vmatpush1.msra.mxu0 %v854
    %943 = vmatprep.subr.mxu0 0.0
    %944 = vmatpush1.msra.mxu0 %v855
    %945 = vmatprep.subr.mxu0 0.0
    %946 = vmatpush1.msra.mxu0 %v856
    %947 = vmatprep.subr.mxu0 0.0
    %948 = vmatpush1.msra.mxu0 %v857
    %949 = vmatprep.subr.mxu0 0.0
    %950 = vmatpush1.msra.mxu0 %v858
    %951 = vmatprep.subr.mxu0 0.0
    %952 = vmatpush1.msra.mxu0 %v859
    %953 = vmatprep.subr.mxu0 0.0
    %954 = vmatpush1.msra.mxu0 %v860
    %955 = vmatprep.subr.mxu0 0.0
    %956 = vmatpush1.msra.mxu0 %v861
    %957 = vmatprep.subr.mxu0 0.0
    %958 = vmatpush1.msra.mxu0 %v862
    %959 = vmatprep.subr.mxu0 0.0
    %960 = vmatpush1.msra.mxu0 %v863
    %961 = vmatprep.subr.mxu0 0.0
    %962 = vmatpush1.msra.mxu0 %v864
    %963 = vmatprep.subr.mxu0 0.0
    %964 = vmatpush1.msra.mxu0 %v865
    %965 = vmatprep.subr.mxu0 0.0
    %966 = vmatpush1.msra.mxu0 %v866
    %967 = vmatprep.subr.mxu0 0.0
    %968 = vmatpush1.msra.mxu0 %v867
    %969 = vmatprep.subr.mxu0 0.0
    %970 = vmatpush1.msra.mxu0 %v868
    %971 = vmatprep.subr.mxu0 0.0
    %972 = vmatpush1.msra.mxu0 %v869
    %973 = vmatprep.mubr.f32.mxu0 %v835
    %974 = vmatmul.mubr.f32.gmra.mrb[0].mxu0 %v834
    %v975 = vpop.f32.mrb[0].mxu0
    %v976 = vadd.f32 %v907, %v975
    %v977 = vpop.f32.mrb[0].mxu0
    %978 = vdwg.mxu0
    %979 = vmatprep.subr.mxu0 0.0
    %980 = vmatpush1.msra.mxu0 %v870
    %981 = vmatprep.subr.mxu0 0.0
    %982 = vmatpush1.msra.mxu0 %v871
    %983 = vmatprep.subr.mxu0 0.0
    %984 = vmatpush1.msra.mxu0 %v872
    %985 = vmatprep.subr.mxu0 0.0
    %986 = vmatpush1.msra.mxu0 %v873
    %987 = vmatprep.subr.mxu0 0.0
    %988 = vmatpush1.msra.mxu0 %v874
    %989 = vmatprep.subr.mxu0 0.0
    %990 = vmatpush1.msra.mxu0 %v875
    %991 = vmatprep.subr.mxu0 0.0
    %992 = vmatpush1.msra.mxu0 %v876
    %993 = vmatprep.subr.mxu0 0.0
    %994 = vmatpush1.msra.mxu0 %v877
    %995 = vmatprep.subr.mxu0 0.0
    %996 = vmatpush1.msra.mxu0 %v878
    %997 = vmatprep.subr.mxu0 0.0
    %998 = vmatpush1.msra.mxu0 %v879
    %999 = vmatprep.subr.mxu0 0.0
    %1000 = vmatpush1.msra.mxu0 %v880
    %1001 = vmatprep.subr.mxu0 0.0
    %1002 = vmatpush1.msra.mxu0 %v881
    %1003 = vmatprep.subr.mxu0 0.0
    %1004 = vmatpush1.msra.mxu0 %v882
    %1005 = vmatprep.subr.mxu0 0.0
    %1006 = vmatpush1.msra.mxu0 %v883
    %1007 = vmatprep.subr.mxu0 0.0
    %1008 = vmatpush1.msra.mxu0 %v884
    %1009 = vmatprep.subr.mxu0 0.0
    %1010 = vmatpush1.msra.mxu0 %v885
    %1011 = vmatprep.subr.mxu0 0.0
    %1012 = vmatpush1.msra.mxu0 %v886
    %1013 = vmatprep.subr.mxu0 0.0
    %1014 = vmatpush1.msra.mxu0 %v887
    %1015 = vmatprep.subr.mxu0 0.0
    %1016 = vmatpush1.msra.mxu0 %v888
    %1017 = vmatprep.subr.mxu0 0.0
    %1018 = vmatpush1.msra.mxu0 %v889
    %1019 = vmatprep.subr.mxu0 0.0
    %1020 = vmatpush1.msra.mxu0 %v890
    %1021 = vmatprep.subr.mxu0 0.0
    %1022 = vmatpush1.msra.mxu0 %v891
    %1023 = vmatprep.subr.mxu0 0.0
    %1024 = vmatpush1.msra.mxu0 %v892
    %1025 = vmatprep.subr.mxu0 0.0
    %1026 = vmatpush1.msra.mxu0 %v893
    %1027 = vmatprep.subr.mxu0 0.0
    %1028 = vmatpush1.msra.mxu0 %v894
    %1029 = vmatprep.subr.mxu0 0.0
    %1030 = vmatpush1.msra.mxu0 %v895
    %1031 = vmatprep.subr.mxu0 0.0
    %1032 = vmatpush1.msra.mxu0 %v896
    %1033 = vmatprep.subr.mxu0 0.0
    %1034 = vmatpush1.msra.mxu0 %v897
    %1035 = vmatprep.subr.mxu0 0.0
    %1036 = vmatpush1.msra.mxu0 %v898
    %1037 = vmatprep.subr.mxu0 0.0
    %1038 = vmatpush1.msra.mxu0 %v899
    %1039 = vmatprep.subr.mxu0 0.0
    %1040 = vmatpush1.msra.mxu0 %v900
    %1041 = vmatprep.subr.mxu0 0.0
    %1042 = vmatpush1.msra.mxu0 %v901
    %1043 = vmatprep.mubr.f32.mxu0 %v837
    %1044 = vmatmul.mubr.f32.gmra.mrb[0].mxu0 %v836
    %v1045 = vpop.f32.mrb[0].mxu0
    %v1046 = vadd.f32 %v976, %v1045
    %v1047 = vpop.f32.mrb[0].mxu0
    %1048 = vdwg.mxu0
    %v1049 = vtanh.pop %v1046
    %1050 = vst [vmem:[%s7] sm:$0x3] %v1049
    // Predicated region
    $region42: #{generator_forward.1} parent=1 // pred_check
      _
    $region43: #{generator_forward.1} parent=1 // pred_check_branch
      %1052 = sbr.rel (0) target = $region45
    $region44: #{generator_forward.1} parent=1 // pred_region
      _
    $region45: #{generator_forward.1} parent=1 // pred_fallthru
      _
    // Predicated region
    $region46: #{generator_forward.1} parent=1 // pred_check
      _
    $region47: #{generator_forward.1} parent=1 // pred_check_branch
      %1054 = sbr.rel (0) target = $region49
    $region48: #{generator_forward.1} parent=1 // pred_region
      _
    $region49: #{generator_forward.1} parent=1 // pred_fallthru
      _
    %1055 = vsyncpa [#allocation3], 1
    %1056 = vsyncpa [#allocation5], 1

</llo_original>
